<compile_context>
chip_gen: v7x
topology: tpu7x:2x2x1
jax: 0.10.0
libtpu: 0.0.40
codegen_flags: <defaults>
</compile_context>

<pallas_src>
import functools

import jax
import jax.numpy as jnp
from jax.experimental import pallas as pl
from jax.experimental.pallas import tpu as pltpu


def _round_up(x, m):
    return (x + m - 1) // m * m


def _pair(v):
    return (v, v) if isinstance(v, int) else tuple(v)


def _default_vmem_limit():
    # Generation-aware scoped-VMEM budget: leave ~16 MiB headroom for Mosaic's
    # internal scratch (v7x: 64 MiB physical -> 48 MiB; v5e/v6e: 128 MiB -> 96 MiB).
    try:
        cap = int(getattr(pltpu.get_tpu_info(), "vmem_capacity_bytes", 64 << 20))
    except Exception:
        cap = 64 << 20
    return int(max(32 << 20, min(cap - (16 << 20), 96 << 20)))


_VMEM_LIMIT = _default_vmem_limit()


# ----------------------------- kernels --------------------------------------


def _matmul_scale_shift_relu_kernel(x_ref, w_ref, sb_ref, o_ref):
    # x_ref: (tm, K) bf16   w_ref: (K, tn) bf16   sb_ref: (2, tn) f32 (scale, shift)
    acc = jnp.dot(x_ref[...], w_ref[...], preferred_element_type=jnp.float32)
    y = acc * sb_ref[0, :] + sb_ref[1, :]
    o_ref[...] = jnp.maximum(y, 0.0).astype(o_ref.dtype)


def _make_gather_conv_kernel(KH, KW, OW, sh, sw, Cin, tile_oh, fuse_taps):
    """KHxKW conv (any stride): gather shifted (phase-split) windows in-kernel,
    run MXU dots, apply BN scale/shift + ReLU on the f32 accumulator."""
    tile_m = tile_oh * OW

    def load_tap(x_ref, row0, kh, kw):
        # x_ref block: (1, Hs, sh, Ws, sw*Cin) bf16 (full padded, phase-split image)
        p, rh = divmod(kh, sh)
        q, rw = divmod(kw, sw)
        win = x_ref[0, pl.ds(row0 + p, tile_oh), rh, q:q + OW,
                    rw * Cin:(rw + 1) * Cin]                  # (tile_oh, OW, Cin)
        return win.reshape(tile_m, Cin)

    def epilogue(acc, sb_ref, o_ref):
        y = acc * sb_ref[0, :] + sb_ref[1, :]
        o_ref[0] = jnp.maximum(y, 0.0).astype(o_ref.dtype)

    if fuse_taps:
        def kernel(x_ref, w_ref, sb_ref, o_ref):
            # w_ref: (KH*KW*Cin, tn) bf16 -- one big-K MXU dot.
            row0 = pl.multiple_of(pl.program_id(1) * tile_oh, 8)
            taps = [load_tap(x_ref, row0, kh, kw)
                    for kh in range(KH) for kw in range(KW)]
            lhs = taps[0] if len(taps) == 1 else jnp.concatenate(taps, axis=-1)
            acc = jnp.dot(lhs, w_ref[...], preferred_element_type=jnp.float32)
            epilogue(acc, sb_ref, o_ref)
        return kernel

    def kernel(x_ref, w_ref, sb_ref, o_ref, acc_ref):
        # w_ref: (KH*KW, Cin, tn) bf16   acc_ref: (tile_m, tn) f32 VMEM scratch.
        row0 = pl.multiple_of(pl.program_id(1) * tile_oh, 8)
        # First tap initializes the accumulator (no zero-init store+load pass).
        acc_ref[...] = jnp.dot(load_tap(x_ref, row0, 0, 0), w_ref[0],
                               preferred_element_type=jnp.float32)
        for t in range(1, KH * KW):
            kh, kw = divmod(t, KW)
            acc_ref[...] += jnp.dot(load_tap(x_ref, row0, kh, kw), w_ref[t],
                                    preferred_element_type=jnp.float32)
        epilogue(acc_ref[...], sb_ref, o_ref)
    return kernel


# --------------------------- pallas wrappers ---------------------------------


def _matmul_scale_shift_relu(lhs, w2d, sb, out_dtype, *, tm, tn):
    M, K = lhs.shape
    K2, cout_pad = w2d.shape
    assert K == K2 and cout_pad % tn == 0 and tm % 16 == 0
    # Small layers: use the full M extent as a single block ("equal full dim"
    # escape of the (8,128) rule); big layers: tm rows (multiple of 16 for bf16).
    tm_eff = min(tm, M)
    grid = (pl.cdiv(M, tm_eff), cout_pad // tn)
    flops = 2 * M * K * cout_pad
    bytes_accessed = (lhs.size * lhs.dtype.itemsize * grid[1]
                      + w2d.size * w2d.dtype.itemsize * grid[0]
                      + M * cout_pad * jnp.dtype(out_dtype).itemsize)
    return pl.pallas_call(
        _matmul_scale_shift_relu_kernel,
        out_shape=jax.ShapeDtypeStruct((M, cout_pad), out_dtype),
        grid=grid,
        in_specs=[
            pl.BlockSpec((tm_eff, K), lambda i, j: (i, 0)),
            pl.BlockSpec((K, tn), lambda i, j: (0, j)),
            pl.BlockSpec((2, tn), lambda i, j: (0, j)),
        ],
        out_specs=pl.BlockSpec((tm_eff, tn), lambda i, j: (i, j)),
        compiler_params=pltpu.CompilerParams(
            dimension_semantics=("parallel", "parallel"),
            vmem_limit_bytes=_VMEM_LIMIT),
        cost_estimate=pl.CostEstimate(flops=int(flops), transcendentals=0,
                                      bytes_accessed=int(bytes_accessed)),
    )(lhs, w2d, sb)


def _gather_conv(x_bf16, w_hwio, sb, out_dtype, *, KH, KW, sh, sw, ph, pw,
                 OH, OW, tn):
    N, H, W, Cin = x_bf16.shape
    cout_pad = w_hwio.shape[-1]
    Cout = sb.shape[-1]  # already padded to cout_pad; slice done by caller

    # Output-row tiling: bounds acc/out blocks to a few MiB for any spatial size.
    target_m = 1024
    tile_oh = min(_round_up(OH, 8), max(8, (target_m // max(OW, 1)) // 8 * 8))
    OH_pad = _round_up(OH, tile_oh)
    n_row_tiles = OH_pad // tile_oh
    tile_m = tile_oh * OW

    # Phase-split (space-to-depth style) padded input so strided windows become
    # plain static slices in-kernel: (N, Hs, sh, Ws, sw*Cin).  Pure reshape.
    hs_needed = OH_pad + (KH - 1) // sh
    ws_needed = OW + (KW - 1) // sw
    H_pad_r = _round_up(max(H + 2 * ph, sh * hs_needed), sh)
    W_pad_r = _round_up(max(W + 2 * pw, sw * ws_needed), sw)
    Hs, Ws = H_pad_r // sh, W_pad_r // sw
    x_pad = jnp.pad(x_bf16, ((0, 0), (ph, H_pad_r - H - ph),
                             (pw, W_pad_r - W - pw), (0, 0)))
    x_resh = x_pad.reshape(N, Hs, sh, Ws, sw * Cin)

    # Fuse the KH*KW taps into one K = KH*KW*Cin MXU dot when lane-aligned.
    fuse_taps = (Cin % 128 == 0) and (KH * KW > 1)
    kernel = _make_gather_conv_kernel(KH, KW, OW, sh, sw, Cin, tile_oh, fuse_taps)
    if fuse_taps:
        w_arg = w_hwio.reshape(KH * KW * Cin, cout_pad)
        w_spec = pl.BlockSpec((KH * KW * Cin, tn), lambda n, r, j: (0, j))
        scratch = []
    else:
        w_arg = w_hwio.reshape(KH * KW, Cin, cout_pad)
        w_spec = pl.BlockSpec((KH * KW, Cin, tn), lambda n, r, j: (0, 0, j))
        scratch = [pltpu.VMEM((tile_m, tn), jnp.float32)]

    flops = 2 * N * OH * OW * KH * KW * Cin * cout_pad
    bytes_accessed = (x_resh.size * x_resh.dtype.itemsize
                      + w_arg.size * w_arg.dtype.itemsize
                      + N * OH_pad * OW * cout_pad * jnp.dtype(out_dtype).itemsize)

    out3d = pl.pallas_call(
        kernel,
        out_shape=jax.ShapeDtypeStruct((N, OH_pad * OW, cout_pad), out_dtype),
        grid=(N, n_row_tiles, cout_pad // tn),
        in_specs=[
            # Full padded image stays resident across the row/cout grid axes.
            pl.BlockSpec((1, Hs, sh, Ws, sw * Cin),
                         lambda n, r, j: (n, 0, 0, 0, 0)),
            w_spec,
            pl.BlockSpec((2, tn), lambda n, r, j: (0, j)),
        ],
        out_specs=pl.BlockSpec((1, tile_m, tn), lambda n, r, j: (n, r, j)),
        scratch_shapes=scratch,
        compiler_params=pltpu.CompilerParams(
            dimension_semantics=("parallel", "parallel", "parallel"),
            vmem_limit_bytes=_VMEM_LIMIT),
        cost_estimate=pl.CostEstimate(flops=int(flops), transcendentals=0,
                                      bytes_accessed=int(bytes_accessed)),
    )(x_resh, w_arg, sb)
    return out3d.reshape(N, OH_pad, OW, cout_pad)[:, :OH]


def _bn_scale_shift(gamma, beta, mean, var, eps):
    inv_std = jax.lax.rsqrt(var.astype(jnp.float32) + eps)
    scale = gamma.astype(jnp.float32) * inv_std
    shift = beta.astype(jnp.float32) - mean.astype(jnp.float32) * scale
    return scale, shift


def basic_conv2d_nhwc(x_nhwc, conv_weight_oihw, gamma, beta, running_mean,
                      running_var, *, stride, padding, eps=1e-3,
                      out_dtype=jnp.bfloat16, tm=1024, tn=None):
    """Fused Conv2d(bias=False) + BatchNorm2d(eval) + ReLU, NHWC in / NHWC out."""
    N, H, W, Cin = x_nhwc.shape
    Cout, Cin_w, KH, KW = conv_weight_oihw.shape
    assert Cin == Cin_w
    sh, sw = _pair(stride)
    ph, pw = _pair(padding)
    OH = (H + 2 * ph - KH) // sh + 1
    OW = (W + 2 * pw - KW) // sw + 1

    # BN (eval) becomes a per-channel f32 scale/shift applied to the f32 conv
    # accumulator inside the kernel (no folding into bf16 weights).
    scale, shift = _bn_scale_shift(gamma, beta, running_mean, running_var, eps)
    cout_pad = _round_up(Cout, 128)          # lane-dense, unmasked vst stores
    w_hwio = jnp.transpose(conv_weight_oihw, (2, 3, 1, 0)).astype(jnp.bfloat16)
    sb = jnp.stack([scale, shift], axis=0)   # (2, Cout) f32
    if cout_pad != Cout:
        w_hwio = jnp.pad(w_hwio, ((0, 0), (0, 0), (0, 0), (0, cout_pad - Cout)))
        sb = jnp.pad(sb, ((0, 0), (0, cout_pad - Cout)))

    if tn is None:
        # NOTE: prefer tn=128 on v5e (4x128x128 MXU); 256 suits v6e/v7x.
        tn = 256 if cout_pad % 256 == 0 else 128
    tn = min(tn, cout_pad)
    assert cout_pad % tn == 0

    x_bf16 = x_nhwc.astype(jnp.bfloat16)

    if (KH, KW) == (1, 1) and (sh, sw) == (1, 1) and (ph, pw) == (0, 0):
        # Fast path: 1x1 stride-1 unpadded conv is a plain matmul on the MXU.
        M = N * H * W
        lhs = x_bf16.reshape(M, Cin)
        w2d = w_hwio.reshape(Cin, cout_pad)
        out2d = _matmul_scale_shift_relu(lhs, w2d, sb, out_dtype, tm=tm, tn=tn)
        return out2d[:, :Cout].reshape(N, OH, OW, Cout)

    out = _gather_conv(x_bf16, w_hwio, sb, out_dtype, KH=KH, KW=KW, sh=sh,
                       sw=sw, ph=ph, pw=pw, OH=OH, OW=OW, tn=tn)
    return out[..., :Cout]


def basic_conv2d(x_nchw, conv_weight_oihw, gamma, beta, running_mean,
                 running_var, *, stride, padding, eps=1e-3):
    """PyTorch-parity boundary: NCHW in/out, echoes the input dtype.
    In a full InceptionResnetV1 forward, call basic_conv2d_nhwc end-to-end in
    NHWC/bf16 instead -- the transposes + f32 I/O here roughly triple HBM
    traffic per layer and exist only for reference comparison."""
    x_nhwc = jnp.transpose(x_nchw, (0, 2, 3, 1))
    out = basic_conv2d_nhwc(x_nhwc, conv_weight_oihw, gamma, beta,
                            running_mean, running_var, stride=stride,
                            padding=padding, eps=eps, out_dtype=x_nchw.dtype)
    return jnp.transpose(out, (0, 3, 1, 2))


def fused_branch_conv1x1(x_nhwc, branches, *, eps=1e-3, out_dtype=jnp.bfloat16,
                         tm=1024, tn=None):
    """Fuse several 1x1/stride-1 BasicConv2d branches that share one input
    (Block35/Block17/Block8 branch heads, Mixed reductions) into a SINGLE
    matmul: the shared activation is read from HBM once instead of per branch.
    `branches` = list of (conv_weight_oihw, gamma, beta, mean, var)."""
    N, H, W, Cin = x_nhwc.shape
    ws, scales, shifts, couts = [], [], [], []
    for (w, gamma, beta, mean, var) in branches:
        Cout, Cin_w, KH, KW = w.shape
        assert (KH, KW) == (1, 1) and Cin_w == Cin
        s, b = _bn_scale_shift(gamma, beta, mean, var, eps)
        ws.append(jnp.transpose(w, (2, 3, 1, 0)).reshape(Cin, Cout))
        scales.append(s)
        shifts.append(b)
        couts.append(Cout)
    w_all = jnp.concatenate(ws, axis=1).astype(jnp.bfloat16)
    sb = jnp.stack([jnp.concatenate(scales), jnp.concatenate(shifts)], axis=0)
    cout_tot = sum(couts)
    cout_pad = _round_up(cout_tot, 128)
    if cout_pad != cout_tot:
        w_all = jnp.pad(w_all, ((0, 0), (0, cout_pad - cout_tot)))
        sb = jnp.pad(sb, ((0, 0), (0, cout_pad - cout_tot)))
    if tn is None:
        tn = 256 if cout_pad % 256 == 0 else 128
    tn = min(tn, cout_pad)
    lhs = x_nhwc.astype(jnp.bfloat16).reshape(N * H * W, Cin)
    out2d = _matmul_scale_shift_relu(lhs, w_all, sb, out_dtype, tm=tm, tn=tn)
    outs, off = [], 0
    for c in couts:
        outs.append(out2d[:, off:off + c].reshape(N, H, W, c))
        off += c
    return outs


# ------------------------------ reference ------------------------------------


def _reference(x, w, gamma, beta, mean, var, *, stride, padding, eps=1e-3):
    sh, sw = _pair(stride)
    ph, pw = _pair(padding)
    y = jax.lax.conv_general_dilated(
        x.astype(jnp.float32), w.astype(jnp.float32),
        window_strides=(sh, sw), padding=((ph, ph), (pw, pw)),
        dimension_numbers=("NCHW", "OIHW", "NCHW"))
    s = (gamma / jnp.sqrt(var + eps)).reshape(1, -1, 1, 1)
    b = (beta - mean * gamma / jnp.sqrt(var + eps)).reshape(1, -1, 1, 1)
    return jnp.maximum(y * s + b, 0.0)


if __name__ == "__main__":
    key = jax.random.PRNGKey(0)

    def make_params(k, Cin, Cout, ksize):
        KH, KW = _pair(ksize)
        k_w, k_g, k_b, k_m, k_v = jax.random.split(k, 5)
        w = jax.random.normal(k_w, (Cout, Cin, KH, KW), jnp.float32) * 0.1
        gamma = jax.random.uniform(k_g, (Cout,), minval=0.5, maxval=1.5)
        beta = jax.random.normal(k_b, (Cout,)) * 0.1
        mean = jax.random.normal(k_m, (Cout,)) * 0.1
        var = jax.random.uniform(k_v, (Cout,), minval=0.5, maxval=1.5)
        return w, gamma, beta, mean, var

    def run_case(N, Cin, Cout, H, W, ksize, stride, padding, k):
        kx, kp = jax.random.split(k)
        x = jax.random.normal(kx, (N, Cin, H, W), jnp.float32)
        params = make_params(kp, Cin, Cout, ksize)
        fn = jax.jit(functools.partial(basic_conv2d, stride=stride,
                                       padding=padding))
        out = jax.block_until_ready(fn(x, *params))
        ref = _reference(x, *params, stride=stride, padding=padding)
        assert out.shape == ref.shape, (out.shape, ref.shape)
        # bf16 MXU operands -> relaxed tolerance vs. the f32 reference
        assert jnp.allclose(out, ref, rtol=5e-2, atol=1e-1), \
            float(jnp.max(jnp.abs(out - ref)))

    keys = jax.random.split(key, 6)
    # Small-shape stand-ins for the BasicConv2d variants used in InceptionResnetV1
    run_case(2, 64, 80, 16, 16, 1, 1, 0, keys[0])              # 1x1 (branch convs)
    run_case(2, 32, 32, 16, 16, 3, 1, 1, keys[1])              # 3x3 s1 p1 (Block35)
    run_case(2, 128, 128, 16, 16, (1, 7), 1, (0, 3), keys[2])  # 1x7 s1 (Block17, fused taps)
    run_case(2, 32, 32, 16, 16, (7, 1), 1, (3, 0), keys[3])    # 7x1 s1 (Block17, per-tap)
    run_case(2, 32, 64, 15, 15, 3, 2, 0, keys[4])              # 3x3 s2 (stem/reductions, strided in-kernel)

    # Fused parallel-branch 1x1s sharing one input (Block35-style branch heads).
    kx, kb0, kb1, kb2 = jax.random.split(keys[5], 4)
    xb = jax.random.normal(kx, (2, 96, 8, 8), jnp.float32)
    branches = [make_params(kb0, 96, 32, 1),
                make_params(kb1, 96, 32, 1),
                make_params(kb2, 96, 64, 1)]
    xb_nhwc = jnp.transpose(xb, (0, 2, 3, 1))
    flat = [p for br in branches for p in br]
    fused_fn = jax.jit(lambda xh, *fl: fused_branch_conv1x1(
        xh, [tuple(fl[i * 5:(i + 1) * 5]) for i in range(3)]))
    outs = jax.block_until_ready(fused_fn(xb_nhwc, *flat))
    for out, br in zip(outs, branches):
        ref = _reference(xb, *br, stride=1, padding=0)
        out_nchw = jnp.transpose(out.astype(jnp.float32), (0, 3, 1, 2))
        assert jnp.allclose(out_nchw, ref, rtol=5e-2, atol=1e-1), \
            float(jnp.max(jnp.abs(out_nchw - ref)))

    print("KERNEL_OK")
</pallas_src>

<mosaic_0001>
module attributes {stable_mosaic.version = 11 : i64} {
  func.func @_matmul_scale_shift_relu_kernel(%arg0: i32, %arg1: i32, %arg2: memref<512x64xbf16, #tpu.memory_space<vmem>>, %arg3: memref<64x128xbf16, #tpu.memory_space<vmem>>, %arg4: memref<2x128xf32, #tpu.memory_space<vmem>>, %arg5: memref<512x128xf32, #tpu.memory_space<vmem>>) attributes {dimension_semantics = [#tpu.dimension_semantics<parallel>, #tpu.dimension_semantics<parallel>], iteration_bounds = array<i64: 1, 1>, scalar_prefetch = 0 : i64, scratch_operands = 0 : i64, tpu.core_type = #tpu.core_type<tc>, window_params = [{transform_indices = @transform_0, window_bounds = array<i64: 512, 64>}, {transform_indices = @transform_1, window_bounds = array<i64: 64, 128>}, {transform_indices = @transform_2, window_bounds = array<i64: 2, 128>}, {transform_indices = @transform_3, window_bounds = array<i64: 512, 128>}]} {
    %c0 = arith.constant 0 : index
    %c0_0 = arith.constant 0 : index
    %0 = vector.load %arg2[%c0, %c0_0] : memref<512x64xbf16, #tpu.memory_space<vmem>>, vector<512x64xbf16>
    %c0_1 = arith.constant 0 : index
    %c0_2 = arith.constant 0 : index
    %1 = vector.load %arg3[%c0_1, %c0_2] : memref<64x128xbf16, #tpu.memory_space<vmem>>, vector<64x128xbf16>
    %cst = arith.constant dense<0.000000e+00> : vector<512x128xf32>
    %2 = tpu.matmul %0, %1, %cst {dimension_numbers = #tpu.dot_dimension_numbers<[1], [0], [0], [1], [0, 0, 1, 1], [], []>} : vector<512x64xbf16>, vector<64x128xbf16>, vector<512x128xf32> -> vector<512x128xf32>
    %c0_3 = arith.constant 0 : index
    %c0_4 = arith.constant 0 : index
    %3 = vector.load %arg4[%c0_3, %c0_4] : memref<2x128xf32, #tpu.memory_space<vmem>>, vector<1x128xf32>
    %4 = vector.shape_cast %3 : vector<1x128xf32> to vector<128xf32>
    %5 = vector.shape_cast %4 : vector<128xf32> to vector<1x128xf32>
    %6 = vector.broadcast %5 : vector<1x128xf32> to vector<512x128xf32>
    %7 = arith.mulf %2, %6 : vector<512x128xf32>
    %c1 = arith.constant 1 : index
    %c0_5 = arith.constant 0 : index
    %8 = vector.load %arg4[%c1, %c0_5] : memref<2x128xf32, #tpu.memory_space<vmem>>, vector<1x128xf32>
    %9 = vector.shape_cast %8 : vector<1x128xf32> to vector<128xf32>
    %10 = vector.shape_cast %9 : vector<128xf32> to vector<1x128xf32>
    %11 = vector.broadcast %10 : vector<1x128xf32> to vector<512x128xf32>
    %12 = arith.addf %7, %11 : vector<512x128xf32>
    %cst_6 = arith.constant 0.000000e+00 : f32
    %13 = vector.broadcast %cst_6 : f32 to vector<512x128xf32>
    %14 = arith.maximumf %12, %13 : vector<512x128xf32>
    %c0_7 = arith.constant 0 : index
    %c0_8 = arith.constant 0 : index
    %15 = vector.load %arg5[%c0_7, %c0_8] : memref<512x128xf32, #tpu.memory_space<vmem>>, vector<512x128xf32>
    tpu.vector_store %arg5[%c0_7, %c0_8], %14 {strides = array<i32>} : memref<512x128xf32, #tpu.memory_space<vmem>>, vector<512x128xf32>,
    return
  }
  func.func @transform_0(%arg0: i32, %arg1: i32) -> (i32, i32) {
    %c0_i32 = arith.constant 0 : i32
    %c0_i32_0 = arith.constant 0 : i32
    return %arg0, %c0_i32 : i32, i32
  }
  func.func @transform_1(%arg0: i32, %arg1: i32) -> (i32, i32) {
    %c0_i32 = arith.constant 0 : i32
    %c0_i32_0 = arith.constant 0 : i32
    return %c0_i32, %arg1 : i32, i32
  }
  func.func @transform_2(%arg0: i32, %arg1: i32) -> (i32, i32) {
    %c0_i32 = arith.constant 0 : i32
    %c0_i32_0 = arith.constant 0 : i32
    return %c0_i32, %arg1 : i32, i32
  }
  func.func @transform_3(%arg0: i32, %arg1: i32) -> (i32, i32) {
    %c0_i32 = arith.constant 0 : i32
    return %arg0, %arg1 : i32, i32
  }
}

</mosaic_0001>

<llo_original>
// kernel: basic_conv2d.1
$region0: #{basic_conv2d.1}
  #allocation0 [shape = 'u32[]', space=smem, size = 0x4, offset = 0x4, fixed_abs, tag = 'smem constant byte address 0x4 - core index']
  #allocation1 [shape = 'u32[144,128]{1,0:T(1,128)}', space=vmem, size = 0x12000, scoped, tag = 'internal scratch']
  %s0 = inlined_call_operand.vmem [shape: bf16[512,64], index: 0, kind: input, shape index: {}]
  %s1 = inlined_call_operand.vmem [shape: bf16[64,128], index: 1, kind: input, shape index: {}]
  %s2 = inlined_call_operand.vmem [shape: f32[2,128], index: 2, kind: input, shape index: {}]
  %s3 = inlined_call_operand.hbm [shape: f32[512,128], index: 3, kind: output, shape index: {}]
  %s4 = sld [smem:[#allocation0]]
  $region22: #{basic_conv2d.1} parent=0
    _
  %s6 = ssub.s32 1, %s4
  %s7 = scalar_select 0, %s6, %s4
  $region1: #{basic_conv2d.1} parent=0
    #allocation2 [shape = 'u8[262144]{0}', space=vmem, size = 0x40000, scoped, tag = 'output window, operand 0, single buffered']
    #allocation3 [shape = 's32[1]{0}', space=sflag, size = 0x4, scoped, tag = 'scoped memory for basic_conv2d.1']
    %8 = vsyncpa [#allocation3], 0
    // Predicated region
    $region2: #{basic_conv2d.1} parent=1 // pred_check
      _
    $region3: #{basic_conv2d.1} parent=1 // pred_check_branch
      %10 = sbr.rel (0) target = $region5
    $region4: #{basic_conv2d.1} parent=1 // pred_region
      _
    $region5: #{basic_conv2d.1} parent=1 // pred_fallthru
      _
    // Predicated region
    $region6: #{basic_conv2d.1} parent=1 // pred_check
      _
    $region7: #{basic_conv2d.1} parent=1 // pred_check_branch
      %12 = sbr.rel (0) target = $region9
    $region8: #{basic_conv2d.1} parent=1 // pred_region
      _
    $region9: #{basic_conv2d.1} parent=1 // pred_fallthru
      _
    // Predicated region
    $region10: #{basic_conv2d.1} parent=1 // pred_check
      _
    $region11: #{basic_conv2d.1} parent=1 // pred_check_branch
      %14 = sbr.rel (0) target = $region13
    $region12: #{basic_conv2d.1} parent=1 // pred_region
      _
    $region13: #{basic_conv2d.1} parent=1 // pred_fallthru
      _
    %v16 = vld [vmem:[%s0] sm:$0xf]
    %v17 = vld [vmem:[%s0 + $0x4] sm:$0xf]
    %v18 = vld [vmem:[%s0 + $0x8] sm:$0xf]
    %v19 = vld [vmem:[%s0 + $0xc] sm:$0xf]
    %v20 = vld [vmem:[%s0 + $0x10] sm:$0xf]
    %v21 = vld [vmem:[%s0 + $0x14] sm:$0xf]
    %v22 = vld [vmem:[%s0 + $0x18] sm:$0xf]
    %v23 = vld [vmem:[%s0 + $0x1c] sm:$0xf]
    %v24 = vld [vmem:[%s0 + $0x20] sm:$0xf]
    %v25 = vld [vmem:[%s0 + $0x24] sm:$0xf]
    %v26 = vld [vmem:[%s0 + $0x28] sm:$0xf]
    %v27 = vld [vmem:[%s0 + $0x2c] sm:$0xf]
    %v28 = vld [vmem:[%s0 + $0x30] sm:$0xf]
    %v29 = vld [vmem:[%s0 + $0x34] sm:$0xf]
    %v30 = vld [vmem:[%s0 + $0x38] sm:$0xf]
    %v31 = vld [vmem:[%s0 + $0x3c] sm:$0xf]
    %v32 = vld [vmem:[%s0 + $0x40] sm:$0xf]
    %v33 = vld [vmem:[%s0 + $0x44] sm:$0xf]
    %v34 = vld [vmem:[%s0 + $0x48] sm:$0xf]
    %v35 = vld [vmem:[%s0 + $0x4c] sm:$0xf]
    %v36 = vld [vmem:[%s0 + $0x50] sm:$0xf]
    %v37 = vld [vmem:[%s0 + $0x54] sm:$0xf]
    %v38 = vld [vmem:[%s0 + $0x58] sm:$0xf]
    %v39 = vld [vmem:[%s0 + $0x5c] sm:$0xf]
    %v40 = vld [vmem:[%s0 + $0x60] sm:$0xf]
    %v41 = vld [vmem:[%s0 + $0x64] sm:$0xf]
    %v42 = vld [vmem:[%s0 + $0x68] sm:$0xf]
    %v43 = vld [vmem:[%s0 + $0x6c] sm:$0xf]
    %v44 = vld [vmem:[%s0 + $0x70] sm:$0xf]
    %v45 = vld [vmem:[%s0 + $0x74] sm:$0xf]
    %v46 = vld [vmem:[%s0 + $0x78] sm:$0xf]
    %v47 = vld [vmem:[%s0 + $0x7c] sm:$0xf]
    %v48 = vld [vmem:[%s0 + $0x80] sm:$0xf]
    %v49 = vld [vmem:[%s0 + $0x84] sm:$0xf]
    %v50 = vld [vmem:[%s0 + $0x88] sm:$0xf]
    %v51 = vld [vmem:[%s0 + $0x8c] sm:$0xf]
    %v52 = vld [vmem:[%s0 + $0x90] sm:$0xf]
    %v53 = vld [vmem:[%s0 + $0x94] sm:$0xf]
    %v54 = vld [vmem:[%s0 + $0x98] sm:$0xf]
    %v55 = vld [vmem:[%s0 + $0x9c] sm:$0xf]
    %v56 = vld [vmem:[%s0 + $0xa0] sm:$0xf]
    %v57 = vld [vmem:[%s0 + $0xa4] sm:$0xf]
    %v58 = vld [vmem:[%s0 + $0xa8] sm:$0xf]
    %v59 = vld [vmem:[%s0 + $0xac] sm:$0xf]
    %v60 = vld [vmem:[%s0 + $0xb0] sm:$0xf]
    %v61 = vld [vmem:[%s0 + $0xb4] sm:$0xf]
    %v62 = vld [vmem:[%s0 + $0xb8] sm:$0xf]
    %v63 = vld [vmem:[%s0 + $0xbc] sm:$0xf]
    %v64 = vld [vmem:[%s0 + $0xc0] sm:$0xf]
    %v65 = vld [vmem:[%s0 + $0xc4] sm:$0xf]
    %v66 = vld [vmem:[%s0 + $0xc8] sm:$0xf]
    %v67 = vld [vmem:[%s0 + $0xcc] sm:$0xf]
    %v68 = vld [vmem:[%s0 + $0xd0] sm:$0xf]
    %v69 = vld [vmem:[%s0 + $0xd4] sm:$0xf]
    %v70 = vld [vmem:[%s0 + $0xd8] sm:$0xf]
    %v71 = vld [vmem:[%s0 + $0xdc] sm:$0xf]
    %v72 = vld [vmem:[%s0 + $0xe0] sm:$0xf]
    %v73 = vld [vmem:[%s0 + $0xe4] sm:$0xf]
    %v74 = vld [vmem:[%s0 + $0xe8] sm:$0xf]
    %v75 = vld [vmem:[%s0 + $0xec] sm:$0xf]
    %v76 = vld [vmem:[%s0 + $0xf0] sm:$0xf]
    %v77 = vld [vmem:[%s0 + $0xf4] sm:$0xf]
    %v78 = vld [vmem:[%s0 + $0xf8] sm:$0xf]
    %v79 = vld [vmem:[%s0 + $0xfc] sm:$0xf]
    %v80 = vld [vmem:[%s1] sm:$0xf]
    %v81 = vld [vmem:[%s1 + $0x4] sm:$0xf]
    %v82 = vld [vmem:[%s1 + $0x8] sm:$0xf]
    %v83 = vld [vmem:[%s1 + $0xc] sm:$0xf]
    %v84 = vld [vmem:[%s1 + $0x10] sm:$0xf]
    %v85 = vld [vmem:[%s1 + $0x14] sm:$0xf]
    %v86 = vld [vmem:[%s1 + $0x18] sm:$0xf]
    %v87 = vld [vmem:[%s1 + $0x1c] sm:$0xf]
    %v152 = vunpack.c.l.b16 %v16
    %v153 = vunpack.c.l.b16 %v17
    %v154 = vunpack.c.l.b16 %v18
    %v155 = vunpack.c.l.b16 %v19
    %v156 = vunpack.c.l.b16 %v20
    %v157 = vunpack.c.l.b16 %v21
    %v158 = vunpack.c.l.b16 %v22
    %v159 = vunpack.c.l.b16 %v23
    %v160 = vunpack.c.l.b16 %v24
    %v161 = vunpack.c.l.b16 %v25
    %v162 = vunpack.c.l.b16 %v26
    %v163 = vunpack.c.l.b16 %v27
    %v164 = vunpack.c.l.b16 %v28
    %v165 = vunpack.c.l.b16 %v29
    %v166 = vunpack.c.l.b16 %v30
    %v167 = vunpack.c.l.b16 %v31
    %v168 = vunpack.c.l.b16 %v32
    %v169 = vunpack.c.l.b16 %v33
    %v170 = vunpack.c.l.b16 %v34
    %v171 = vunpack.c.l.b16 %v35
    %v172 = vunpack.c.l.b16 %v36
    %v173 = vunpack.c.l.b16 %v37
    %v174 = vunpack.c.l.b16 %v38
    %v175 = vunpack.c.l.b16 %v39
    %v176 = vunpack.c.l.b16 %v40
    %v177 = vunpack.c.l.b16 %v41
    %v178 = vunpack.c.l.b16 %v42
    %v179 = vunpack.c.l.b16 %v43
    %v180 = vunpack.c.l.b16 %v44
    %v181 = vunpack.c.l.b16 %v45
    %v182 = vunpack.c.l.b16 %v46
    %v183 = vunpack.c.l.b16 %v47
    %v184 = vunpack.c.l.b16 %v48
    %v185 = vunpack.c.l.b16 %v49
    %v186 = vunpack.c.l.b16 %v50
    %v187 = vunpack.c.l.b16 %v51
    %v188 = vunpack.c.l.b16 %v52
    %v189 = vunpack.c.l.b16 %v53
    %v190 = vunpack.c.l.b16 %v54
    %v191 = vunpack.c.l.b16 %v55
    %v192 = vunpack.c.l.b16 %v56
    %v193 = vunpack.c.l.b16 %v57
    %v194 = vunpack.c.l.b16 %v58
    %v195 = vunpack.c.l.b16 %v59
    %v196 = vunpack.c.l.b16 %v60
    %v197 = vunpack.c.l.b16 %v61
    %v198 = vunpack.c.l.b16 %v62
    %v199 = vunpack.c.l.b16 %v63
    %v200 = vunpack.c.l.b16 %v64
    %v201 = vunpack.c.l.b16 %v65
    %v202 = vunpack.c.l.b16 %v66
    %v203 = vunpack.c.l.b16 %v67
    %v204 = vunpack.c.l.b16 %v68
    %v205 = vunpack.c.l.b16 %v69
    %v206 = vunpack.c.l.b16 %v70
    %v207 = vunpack.c.l.b16 %v71
    %v208 = vunpack.c.l.b16 %v72
    %v209 = vunpack.c.l.b16 %v73
    %v210 = vunpack.c.l.b16 %v74
    %v211 = vunpack.c.l.b16 %v75
    %v212 = vunpack.c.l.b16 %v76
    %v213 = vunpack.c.l.b16 %v77
    %v214 = vunpack.c.l.b16 %v78
    %v215 = vunpack.c.l.b16 %v79
    %v216 = vpack.c.b16 %v153, %v152
    %v217 = vpack.c.b16 %v155, %v154
    %v218 = vpack.c.b16 %v157, %v156
    %v219 = vpack.c.b16 %v159, %v158
    %v220 = vpack.c.b16 %v161, %v160
    %v221 = vpack.c.b16 %v163, %v162
    %v222 = vpack.c.b16 %v165, %v164
    %v223 = vpack.c.b16 %v167, %v166
    %v224 = vpack.c.b16 %v169, %v168
    %v225 = vpack.c.b16 %v171, %v170
    %v226 = vpack.c.b16 %v173, %v172
    %v227 = vpack.c.b16 %v175, %v174
    %v228 = vpack.c.b16 %v177, %v176
    %v229 = vpack.c.b16 %v179, %v178
    %v230 = vpack.c.b16 %v181, %v180
    %v231 = vpack.c.b16 %v183, %v182
    %v232 = vpack.c.b16 %v185, %v184
    %v233 = vpack.c.b16 %v187, %v186
    %v234 = vpack.c.b16 %v189, %v188
    %v235 = vpack.c.b16 %v191, %v190
    %v236 = vpack.c.b16 %v193, %v192
    %v237 = vpack.c.b16 %v195, %v194
    %v238 = vpack.c.b16 %v197, %v196
    %v239 = vpack.c.b16 %v199, %v198
    %v240 = vpack.c.b16 %v201, %v200
    %v241 = vpack.c.b16 %v203, %v202
    %v242 = vpack.c.b16 %v205, %v204
    %v243 = vpack.c.b16 %v207, %v206
    %v244 = vpack.c.b16 %v209, %v208
    %v245 = vpack.c.b16 %v211, %v210
    %v246 = vpack.c.b16 %v213, %v212
    %v247 = vpack.c.b16 %v215, %v214
    %v256 = vunpack.c.l.b16 %v80
    %v257 = vunpack.c.l.b16 %v81
    %v258 = vunpack.c.l.b16 %v82
    %v259 = vunpack.c.l.b16 %v83
    %v260 = vunpack.c.l.b16 %v84
    %v261 = vunpack.c.l.b16 %v85
    %v262 = vunpack.c.l.b16 %v86
    %v263 = vunpack.c.l.b16 %v87
    %v264 = vpack.c.b16 %v257, %v256
    %v265 = vpack.c.b16 %v259, %v258
    %v266 = vpack.c.b16 %v261, %v260
    %v267 = vpack.c.b16 %v263, %v262
    %vm272 = vcmask 523264
    %v274 = vsel %vm272, %v216, 0
    %v277 = vsel %vm272, %v217, 0
    %v280 = vsel %vm272, %v218, 0
    %v283 = vsel %vm272, %v219, 0
    %v286 = vsel %vm272, %v220, 0
    %v289 = vsel %vm272, %v221, 0
    %v292 = vsel %vm272, %v222, 0
    %v295 = vsel %vm272, %v223, 0
    %v298 = vsel %vm272, %v224, 0
    %v301 = vsel %vm272, %v225, 0
    %v304 = vsel %vm272, %v226, 0
    %v307 = vsel %vm272, %v227, 0
    %v310 = vsel %vm272, %v228, 0
    %v313 = vsel %vm272, %v229, 0
    %v316 = vsel %vm272, %v230, 0
    %v319 = vsel %vm272, %v231, 0
    %v322 = vsel %vm272, %v232, 0
    %v325 = vsel %vm272, %v233, 0
    %v328 = vsel %vm272, %v234, 0
    %v331 = vsel %vm272, %v235, 0
    %v334 = vsel %vm272, %v236, 0
    %v337 = vsel %vm272, %v237, 0
    %v340 = vsel %vm272, %v238, 0
    %v343 = vsel %vm272, %v239, 0
    %v346 = vsel %vm272, %v240, 0
    %v349 = vsel %vm272, %v241, 0
    %v352 = vsel %vm272, %v242, 0
    %v355 = vsel %vm272, %v243, 0
    %v358 = vsel %vm272, %v244, 0
    %v361 = vsel %vm272, %v245, 0
    %v364 = vsel %vm272, %v246, 0
    %v367 = vsel %vm272, %v247, 0
    %369 = vmatprep.subr.bf16.mxu0 0
    %370 = vmatpush1.bf16.msra.mxu0 %v264
    %371 = vmatprep.subr.bf16.mxu0 0
    %372 = vmatpush1.bf16.msra.mxu0 %v265
    %373 = vmatprep.subr.bf16.mxu0 0
    %374 = vmatpush1.bf16.msra.mxu0 %v266
    %375 = vmatprep.subr.bf16.mxu0 0
    %376 = vmatpush1.bf16.msra.mxu0 %v267
    %377 = vmatprep.subr.bf16.mxu0 0
    %378 = vmatpush1.bf16.msra.mxu0 0
    %379 = vmatprep.subr.bf16.mxu0 0
    %380 = vmatpush1.bf16.msra.mxu0 0
    %381 = vmatprep.subr.bf16.mxu0 0
    %382 = vmatpush1.bf16.msra.mxu0 0
    %383 = vmatprep.subr.bf16.mxu0 0
    %384 = vmatpush1.bf16.msra.mxu0 0
    %385 = vmatprep.subr.bf16.mxu0 0
    %386 = vmatpush1.bf16.msra.mxu0 0
    %387 = vmatprep.subr.bf16.mxu0 0
    %388 = vmatpush1.bf16.msra.mxu0 0
    %389 = vmatprep.subr.bf16.mxu0 0
    %390 = vmatpush1.bf16.msra.mxu0 0
    %391 = vmatprep.subr.bf16.mxu0 0
    %392 = vmatpush1.bf16.msra.mxu0 0
    %393 = vmatprep.subr.bf16.mxu0 0
    %394 = vmatpush1.bf16.msra.mxu0 0
    %395 = vmatprep.subr.bf16.mxu0 0
    %396 = vmatpush1.bf16.msra.mxu0 0
    %397 = vmatprep.subr.bf16.mxu0 0
    %398 = vmatpush1.bf16.msra.mxu0 0
    %399 = vmatprep.subr.bf16.mxu0 0
    %400 = vmatpush1.bf16.msra.mxu0 0
    %401 = vmatprep.mubr.bf16.mxu0 0
    %402 = vmatmul.mubr.bf16.gmra.mrb[0].mxu0 %v274
    %v403 = vpop.f32.mrb[0].mxu0
    %v404 = vadd.f32 0.0, %v403
    %v405 = vpop.f32.mrb[0].mxu0
    %v406 = vpop.f32.mrb[0].mxu0
    %v407 = vadd.f32 0.0, %v406
    %v408 = vpop.f32.mrb[0].mxu0
    %409 = vmatprep.mubr.bf16.mxu0 0
    %410 = vmatmul.mubr.bf16.gmra.mrb[0].mxu0 %v277
    %v411 = vpop.f32.mrb[0].mxu0
    %v412 = vadd.f32 0.0, %v411
    %v413 = vpop.f32.mrb[0].mxu0
    %v414 = vpop.f32.mrb[0].mxu0
    %v415 = vadd.f32 0.0, %v414
    %v416 = vpop.f32.mrb[0].mxu0
    %417 = vmatprep.mubr.bf16.mxu0 0
    %418 = vmatmul.mubr.bf16.gmra.mrb[0].mxu0 %v280
    %v419 = vpop.f32.mrb[0].mxu0
    %v420 = vadd.f32 0.0, %v419
    %v421 = vpop.f32.mrb[0].mxu0
    %v422 = vpop.f32.mrb[0].mxu0
    %v423 = vadd.f32 0.0, %v422
    %v424 = vpop.f32.mrb[0].mxu0
    %425 = vmatprep.mubr.bf16.mxu0 0
    %426 = vmatmul.mubr.bf16.gmra.mrb[0].mxu0 %v283
    %v427 = vpop.f32.mrb[0].mxu0
    %v428 = vadd.f32 0.0, %v427
    %v429 = vpop.f32.mrb[0].mxu0
    %v430 = vpop.f32.mrb[0].mxu0
    %v431 = vadd.f32 0.0, %v430
    %v432 = vpop.f32.mrb[0].mxu0
    %433 = vmatprep.mubr.bf16.mxu0 0
    %434 = vmatmul.mubr.bf16.gmra.mrb[0].mxu0 %v286
    %v435 = vpop.f32.mrb[0].mxu0
    %v436 = vadd.f32 0.0, %v435
    %v437 = vpop.f32.mrb[0].mxu0
    %v438 = vpop.f32.mrb[0].mxu0
    %v439 = vadd.f32 0.0, %v438
    %v440 = vpop.f32.mrb[0].mxu0
    %441 = vmatprep.mubr.bf16.mxu0 0
    %442 = vmatmul.mubr.bf16.gmra.mrb[0].mxu0 %v289
    %v443 = vpop.f32.mrb[0].mxu0
    %v444 = vadd.f32 0.0, %v443
    %v445 = vpop.f32.mrb[0].mxu0
    %v446 = vpop.f32.mrb[0].mxu0
    %v447 = vadd.f32 0.0, %v446
    %v448 = vpop.f32.mrb[0].mxu0
    %449 = vmatprep.mubr.bf16.mxu0 0
    %450 = vmatmul.mubr.bf16.gmra.mrb[0].mxu0 %v292
    %v451 = vpop.f32.mrb[0].mxu0
    %v452 = vadd.f32 0.0, %v451
    %v453 = vpop.f32.mrb[0].mxu0
    %v454 = vpop.f32.mrb[0].mxu0
    %v455 = vadd.f32 0.0, %v454
    %v456 = vpop.f32.mrb[0].mxu0
    %457 = vmatprep.mubr.bf16.mxu0 0
    %458 = vmatmul.mubr.bf16.gmra.mrb[0].mxu0 %v295
    %v459 = vpop.f32.mrb[0].mxu0
    %v460 = vadd.f32 0.0, %v459
    %v461 = vpop.f32.mrb[0].mxu0
    %v462 = vpop.f32.mrb[0].mxu0
    %v463 = vadd.f32 0.0, %v462
    %v464 = vpop.f32.mrb[0].mxu0
    %465 = vmatprep.mubr.bf16.mxu0 0
    %466 = vmatmul.mubr.bf16.gmra.mrb[0].mxu0 %v298
    %v467 = vpop.f32.mrb[0].mxu0
    %v468 = vadd.f32 0.0, %v467
    %v469 = vpop.f32.mrb[0].mxu0
    %v470 = vpop.f32.mrb[0].mxu0
    %v471 = vadd.f32 0.0, %v470
    %v472 = vpop.f32.mrb[0].mxu0
    %473 = vmatprep.mubr.bf16.mxu0 0
    %474 = vmatmul.mubr.bf16.gmra.mrb[0].mxu0 %v301
    %v475 = vpop.f32.mrb[0].mxu0
    %v476 = vadd.f32 0.0, %v475
    %v477 = vpop.f32.mrb[0].mxu0
    %v478 = vpop.f32.mrb[0].mxu0
    %v479 = vadd.f32 0.0, %v478
    %v480 = vpop.f32.mrb[0].mxu0
    %481 = vmatprep.mubr.bf16.mxu0 0
    %482 = vmatmul.mubr.bf16.gmra.mrb[0].mxu0 %v304
    %v483 = vpop.f32.mrb[0].mxu0
    %v484 = vadd.f32 0.0, %v483
    %v485 = vpop.f32.mrb[0].mxu0
    %v486 = vpop.f32.mrb[0].mxu0
    %v487 = vadd.f32 0.0, %v486
    %v488 = vpop.f32.mrb[0].mxu0
    %489 = vmatprep.mubr.bf16.mxu0 0
    %490 = vmatmul.mubr.bf16.gmra.mrb[0].mxu0 %v307
    %v491 = vpop.f32.mrb[0].mxu0
    %v492 = vadd.f32 0.0, %v491
    %v493 = vpop.f32.mrb[0].mxu0
    %v494 = vpop.f32.mrb[0].mxu0
    %v495 = vadd.f32 0.0, %v494
    %v496 = vpop.f32.mrb[0].mxu0
    %497 = vmatprep.mubr.bf16.mxu0 0
    %498 = vmatmul.mubr.bf16.gmra.mrb[0].mxu0 %v310
    %v499 = vpop.f32.mrb[0].mxu0
    %v500 = vadd.f32 0.0, %v499
    %v501 = vpop.f32.mrb[0].mxu0
    %v502 = vpop.f32.mrb[0].mxu0
    %v503 = vadd.f32 0.0, %v502
    %v504 = vpop.f32.mrb[0].mxu0
    %505 = vmatprep.mubr.bf16.mxu0 0
    %506 = vmatmul.mubr.bf16.gmra.mrb[0].mxu0 %v313
    %v507 = vpop.f32.mrb[0].mxu0
    %v508 = vadd.f32 0.0, %v507
    %v509 = vpop.f32.mrb[0].mxu0
    %v510 = vpop.f32.mrb[0].mxu0
    %v511 = vadd.f32 0.0, %v510
    %v512 = vpop.f32.mrb[0].mxu0
    %513 = vmatprep.mubr.bf16.mxu0 0
    %514 = vmatmul.mubr.bf16.gmra.mrb[0].mxu0 %v316
    %v515 = vpop.f32.mrb[0].mxu0
    %v516 = vadd.f32 0.0, %v515
    %v517 = vpop.f32.mrb[0].mxu0
    %v518 = vpop.f32.mrb[0].mxu0
    %v519 = vadd.f32 0.0, %v518
    %v520 = vpop.f32.mrb[0].mxu0
    %521 = vmatprep.mubr.bf16.mxu0 0
    %522 = vmatmul.mubr.bf16.gmra.mrb[0].mxu0 %v319
    %v523 = vpop.f32.mrb[0].mxu0
    %v524 = vadd.f32 0.0, %v523
    %v525 = vpop.f32.mrb[0].mxu0
    %v526 = vpop.f32.mrb[0].mxu0
    %v527 = vadd.f32 0.0, %v526
    %v528 = vpop.f32.mrb[0].mxu0
    %529 = vmatprep.mubr.bf16.mxu0 0
    %530 = vmatmul.mubr.bf16.gmra.mrb[0].mxu0 %v322
    %v531 = vpop.f32.mrb[0].mxu0
    %v532 = vadd.f32 0.0, %v531
    %v533 = vpop.f32.mrb[0].mxu0
    %v534 = vpop.f32.mrb[0].mxu0
    %v535 = vadd.f32 0.0, %v534
    %v536 = vpop.f32.mrb[0].mxu0
    %537 = vmatprep.mubr.bf16.mxu0 0
    %538 = vmatmul.mubr.bf16.gmra.mrb[0].mxu0 %v325
    %v539 = vpop.f32.mrb[0].mxu0
    %v540 = vadd.f32 0.0, %v539
    %v541 = vpop.f32.mrb[0].mxu0
    %v542 = vpop.f32.mrb[0].mxu0
    %v543 = vadd.f32 0.0, %v542
    %v544 = vpop.f32.mrb[0].mxu0
    %545 = vmatprep.mubr.bf16.mxu0 0
    %546 = vmatmul.mubr.bf16.gmra.mrb[0].mxu0 %v328
    %v547 = vpop.f32.mrb[0].mxu0
    %v548 = vadd.f32 0.0, %v547
    %v549 = vpop.f32.mrb[0].mxu0
    %v550 = vpop.f32.mrb[0].mxu0
    %v551 = vadd.f32 0.0, %v550
    %v552 = vpop.f32.mrb[0].mxu0
    %553 = vmatprep.mubr.bf16.mxu0 0
    %554 = vmatmul.mubr.bf16.gmra.mrb[0].mxu0 %v331
    %v555 = vpop.f32.mrb[0].mxu0
    %v556 = vadd.f32 0.0, %v555
    %v557 = vpop.f32.mrb[0].mxu0
    %v558 = vpop.f32.mrb[0].mxu0
    %v559 = vadd.f32 0.0, %v558
    %v560 = vpop.f32.mrb[0].mxu0
    %561 = vmatprep.mubr.bf16.mxu0 0
    %562 = vmatmul.mubr.bf16.gmra.mrb[0].mxu0 %v334
    %v563 = vpop.f32.mrb[0].mxu0
    %v564 = vadd.f32 0.0, %v563
    %v565 = vpop.f32.mrb[0].mxu0
    %v566 = vpop.f32.mrb[0].mxu0
    %v567 = vadd.f32 0.0, %v566
    %v568 = vpop.f32.mrb[0].mxu0
    %569 = vmatprep.mubr.bf16.mxu0 0
    %570 = vmatmul.mubr.bf16.gmra.mrb[0].mxu0 %v337
    %v571 = vpop.f32.mrb[0].mxu0
    %v572 = vadd.f32 0.0, %v571
    %v573 = vpop.f32.mrb[0].mxu0
    %v574 = vpop.f32.mrb[0].mxu0
    %v575 = vadd.f32 0.0, %v574
    %v576 = vpop.f32.mrb[0].mxu0
    %577 = vmatprep.mubr.bf16.mxu0 0
    %578 = vmatmul.mubr.bf16.gmra.mrb[0].mxu0 %v340
    %v579 = vpop.f32.mrb[0].mxu0
    %v580 = vadd.f32 0.0, %v579
    %v581 = vpop.f32.mrb[0].mxu0
    %v582 = vpop.f32.mrb[0].mxu0
    %v583 = vadd.f32 0.0, %v582
    %v584 = vpop.f32.mrb[0].mxu0
    %585 = vmatprep.mubr.bf16.mxu0 0
    %586 = vmatmul.mubr.bf16.gmra.mrb[0].mxu0 %v343
    %v587 = vpop.f32.mrb[0].mxu0
    %v588 = vadd.f32 0.0, %v587
    %v589 = vpop.f32.mrb[0].mxu0
    %v590 = vpop.f32.mrb[0].mxu0
    %v591 = vadd.f32 0.0, %v590
    %v592 = vpop.f32.mrb[0].mxu0
    %593 = vmatprep.mubr.bf16.mxu0 0
    %594 = vmatmul.mubr.bf16.gmra.mrb[0].mxu0 %v346
    %v595 = vpop.f32.mrb[0].mxu0
    %v596 = vadd.f32 0.0, %v595
    %v597 = vpop.f32.mrb[0].mxu0
    %v598 = vpop.f32.mrb[0].mxu0
    %v599 = vadd.f32 0.0, %v598
    %v600 = vpop.f32.mrb[0].mxu0
    %601 = vmatprep.mubr.bf16.mxu0 0
    %602 = vmatmul.mubr.bf16.gmra.mrb[0].mxu0 %v349
    %v603 = vpop.f32.mrb[0].mxu0
    %v604 = vadd.f32 0.0, %v603
    %v605 = vpop.f32.mrb[0].mxu0
    %v606 = vpop.f32.mrb[0].mxu0
    %v607 = vadd.f32 0.0, %v606
    %v608 = vpop.f32.mrb[0].mxu0
    %609 = vmatprep.mubr.bf16.mxu0 0
    %610 = vmatmul.mubr.bf16.gmra.mrb[0].mxu0 %v352
    %v611 = vpop.f32.mrb[0].mxu0
    %v612 = vadd.f32 0.0, %v611
    %v613 = vpop.f32.mrb[0].mxu0
    %v614 = vpop.f32.mrb[0].mxu0
    %v615 = vadd.f32 0.0, %v614
    %v616 = vpop.f32.mrb[0].mxu0
    %617 = vmatprep.mubr.bf16.mxu0 0
    %618 = vmatmul.mubr.bf16.gmra.mrb[0].mxu0 %v355
    %v619 = vpop.f32.mrb[0].mxu0
    %v620 = vadd.f32 0.0, %v619
    %v621 = vpop.f32.mrb[0].mxu0
    %v622 = vpop.f32.mrb[0].mxu0
    %v623 = vadd.f32 0.0, %v622
    %v624 = vpop.f32.mrb[0].mxu0
    %625 = vmatprep.mubr.bf16.mxu0 0
    %626 = vmatmul.mubr.bf16.gmra.mrb[0].mxu0 %v358
    %v627 = vpop.f32.mrb[0].mxu0
    %v628 = vadd.f32 0.0, %v627
    %v629 = vpop.f32.mrb[0].mxu0
    %v630 = vpop.f32.mrb[0].mxu0
    %v631 = vadd.f32 0.0, %v630
    %v632 = vpop.f32.mrb[0].mxu0
    %633 = vmatprep.mubr.bf16.mxu0 0
    %634 = vmatmul.mubr.bf16.gmra.mrb[0].mxu0 %v361
    %v635 = vpop.f32.mrb[0].mxu0
    %v636 = vadd.f32 0.0, %v635
    %v637 = vpop.f32.mrb[0].mxu0
    %v638 = vpop.f32.mrb[0].mxu0
    %v639 = vadd.f32 0.0, %v638
    %v640 = vpop.f32.mrb[0].mxu0
    %641 = vmatprep.mubr.bf16.mxu0 0
    %642 = vmatmul.mubr.bf16.gmra.mrb[0].mxu0 %v364
    %v643 = vpop.f32.mrb[0].mxu0
    %v644 = vadd.f32 0.0, %v643
    %v645 = vpop.f32.mrb[0].mxu0
    %v646 = vpop.f32.mrb[0].mxu0
    %v647 = vadd.f32 0.0, %v646
    %v648 = vpop.f32.mrb[0].mxu0
    %649 = vmatprep.mubr.bf16.mxu0 0
    %650 = vmatmul.mubr.bf16.gmra.mrb[0].mxu0 %v367
    %v651 = vpop.f32.mrb[0].mxu0
    %v652 = vadd.f32 0.0, %v651
    %v653 = vpop.f32.mrb[0].mxu0
    %v654 = vpop.f32.mrb[0].mxu0
    %v655 = vadd.f32 0.0, %v654
    %v656 = vpop.f32.mrb[0].mxu0
    %657 = vdwg.mxu0
    %v658 = vld [vmem:[%s2] sm:$0x1]
    %v659 = vlaneseq
    %v660 = vshrl.u32 %v659, 7
    %v661 = vsub.s32 0, %v660
    %v662 = vrot.slane %v658, %v661
    %v663 = vmul.f32 %v404, %v662
    %v664 = vmul.f32 %v407, %v662
    %v665 = vmul.f32 %v412, %v662
    %v666 = vmul.f32 %v415, %v662
    %v667 = vmul.f32 %v420, %v662
    %v668 = vmul.f32 %v423, %v662
    %v669 = vmul.f32 %v428, %v662
    %v670 = vmul.f32 %v431, %v662
    %v671 = vmul.f32 %v436, %v662
    %v672 = vmul.f32 %v439, %v662
    %v673 = vmul.f32 %v444, %v662
    %v674 = vmul.f32 %v447, %v662
    %v675 = vmul.f32 %v452, %v662
    %v676 = vmul.f32 %v455, %v662
    %v677 = vmul.f32 %v460, %v662
    %v678 = vmul.f32 %v463, %v662
    %v679 = vmul.f32 %v468, %v662
    %v680 = vmul.f32 %v471, %v662
    %v681 = vmul.f32 %v476, %v662
    %v682 = vmul.f32 %v479, %v662
    %v683 = vmul.f32 %v484, %v662
    %v684 = vmul.f32 %v487, %v662
    %v685 = vmul.f32 %v492, %v662
    %v686 = vmul.f32 %v495, %v662
    %v687 = vmul.f32 %v500, %v662
    %v688 = vmul.f32 %v503, %v662
    %v689 = vmul.f32 %v508, %v662
    %v690 = vmul.f32 %v511, %v662
    %v691 = vmul.f32 %v516, %v662
    %v692 = vmul.f32 %v519, %v662
    %v693 = vmul.f32 %v524, %v662
    %v694 = vmul.f32 %v527, %v662
    %v695 = vmul.f32 %v532, %v662
    %v696 = vmul.f32 %v535, %v662
    %v697 = vmul.f32 %v540, %v662
    %v698 = vmul.f32 %v543, %v662
    %v699 = vmul.f32 %v548, %v662
    %v700 = vmul.f32 %v551, %v662
    %v701 = vmul.f32 %v556, %v662
    %v702 = vmul.f32 %v559, %v662
    %v703 = vmul.f32 %v564, %v662
    %v704 = vmul.f32 %v567, %v662
    %v705 = vmul.f32 %v572, %v662
    %v706 = vmul.f32 %v575, %v662
    %v707 = vmul.f32 %v580, %v662
    %v708 = vmul.f32 %v583, %v662
    %v709 = vmul.f32 %v588, %v662
    %v710 = vmul.f32 %v591, %v662
    %v711 = vmul.f32 %v596, %v662
    %v712 = vmul.f32 %v599, %v662
    %v713 = vmul.f32 %v604, %v662
    %v714 = vmul.f32 %v607, %v662
    %v715 = vmul.f32 %v612, %v662
    %v716 = vmul.f32 %v615, %v662
    %v717 = vmul.f32 %v620, %v662
    %v718 = vmul.f32 %v623, %v662
    %v719 = vmul.f32 %v628, %v662
    %v720 = vmul.f32 %v631, %v662
    %v721 = vmul.f32 %v636, %v662
    %v722 = vmul.f32 %v639, %v662
    %v723 = vmul.f32 %v644, %v662
    %v724 = vmul.f32 %v647, %v662
    %v725 = vmul.f32 %v652, %v662
    %v726 = vmul.f32 %v655, %v662
    %v727 = vld [vmem:[%s2 + $0x1] sm:$0x1]
    %v728 = vlaneseq
    %v729 = vshrl.u32 %v728, 7
    %v730 = vsub.s32 0, %v729
    %v731 = vrot.slane %v727, %v730
    %v732 = vadd.f32 %v663, %v731
    %v733 = vadd.f32 %v664, %v731
    %v734 = vadd.f32 %v665, %v731
    %v735 = vadd.f32 %v666, %v731
    %v736 = vadd.f32 %v667, %v731
    %v737 = vadd.f32 %v668, %v731
    %v738 = vadd.f32 %v669, %v731
    %v739 = vadd.f32 %v670, %v731
    %v740 = vadd.f32 %v671, %v731
    %v741 = vadd.f32 %v672, %v731
    %v742 = vadd.f32 %v673, %v731
    %v743 = vadd.f32 %v674, %v731
    %v744 = vadd.f32 %v675, %v731
    %v745 = vadd.f32 %v676, %v731
    %v746 = vadd.f32 %v677, %v731
    %v747 = vadd.f32 %v678, %v731
    %v748 = vadd.f32 %v679, %v731
    %v749 = vadd.f32 %v680, %v731
    %v750 = vadd.f32 %v681, %v731
    %v751 = vadd.f32 %v682, %v731
    %v752 = vadd.f32 %v683, %v731
    %v753 = vadd.f32 %v684, %v731
    %v754 = vadd.f32 %v685, %v731
    %v755 = vadd.f32 %v686, %v731
    %v756 = vadd.f32 %v687, %v731
    %v757 = vadd.f32 %v688, %v731
    %v758 = vadd.f32 %v689, %v731
    %v759 = vadd.f32 %v690, %v731
    %v760 = vadd.f32 %v691, %v731
    %v761 = vadd.f32 %v692, %v731
    %v762 = vadd.f32 %v693, %v731
    %v763 = vadd.f32 %v694, %v731
    %v764 = vadd.f32 %v695, %v731
    %v765 = vadd.f32 %v696, %v731
    %v766 = vadd.f32 %v697, %v731
    %v767 = vadd.f32 %v698, %v731
    %v768 = vadd.f32 %v699, %v731
    %v769 = vadd.f32 %v700, %v731
    %v770 = vadd.f32 %v701, %v731
    %v771 = vadd.f32 %v702, %v731
    %v772 = vadd.f32 %v703, %v731
    %v773 = vadd.f32 %v704, %v731
    %v774 = vadd.f32 %v705, %v731
    %v775 = vadd.f32 %v706, %v731
    %v776 = vadd.f32 %v707, %v731
    %v777 = vadd.f32 %v708, %v731
    %v778 = vadd.f32 %v709, %v731
    %v779 = vadd.f32 %v710, %v731
    %v780 = vadd.f32 %v711, %v731
    %v781 = vadd.f32 %v712, %v731
    %v782 = vadd.f32 %v713, %v731
    %v783 = vadd.f32 %v714, %v731
    %v784 = vadd.f32 %v715, %v731
    %v785 = vadd.f32 %v716, %v731
    %v786 = vadd.f32 %v717, %v731
    %v787 = vadd.f32 %v718, %v731
    %v788 = vadd.f32 %v719, %v731
    %v789 = vadd.f32 %v720, %v731
    %v790 = vadd.f32 %v721, %v731
    %v791 = vadd.f32 %v722, %v731
    %v792 = vadd.f32 %v723, %v731
    %v793 = vadd.f32 %v724, %v731
    %v794 = vadd.f32 %v725, %v731
    %v795 = vadd.f32 %v726, %v731
    %v796 = vmax.f32 %v732, 0.0
    %v797 = vmax.f32 %v733, 0.0
    %v798 = vmax.f32 %v734, 0.0
    %v799 = vmax.f32 %v735, 0.0
    %v800 = vmax.f32 %v736, 0.0
    %v801 = vmax.f32 %v737, 0.0
    %v802 = vmax.f32 %v738, 0.0
    %v803 = vmax.f32 %v739, 0.0
    %v804 = vmax.f32 %v740, 0.0
    %v805 = vmax.f32 %v741, 0.0
    %v806 = vmax.f32 %v742, 0.0
    %v807 = vmax.f32 %v743, 0.0
    %v808 = vmax.f32 %v744, 0.0
    %v809 = vmax.f32 %v745, 0.0
    %v810 = vmax.f32 %v746, 0.0
    %v811 = vmax.f32 %v747, 0.0
    %v812 = vmax.f32 %v748, 0.0
    %v813 = vmax.f32 %v749, 0.0
    %v814 = vmax.f32 %v750, 0.0
    %v815 = vmax.f32 %v751, 0.0
    %v816 = vmax.f32 %v752, 0.0
    %v817 = vmax.f32 %v753, 0.0
    %v818 = vmax.f32 %v754, 0.0
    %v819 = vmax.f32 %v755, 0.0
    %v820 = vmax.f32 %v756, 0.0
    %v821 = vmax.f32 %v757, 0.0
    %v822 = vmax.f32 %v758, 0.0
    %v823 = vmax.f32 %v759, 0.0
    %v824 = vmax.f32 %v760, 0.0
    %v825 = vmax.f32 %v761, 0.0
    %v826 = vmax.f32 %v762, 0.0
    %v827 = vmax.f32 %v763, 0.0
    %v828 = vmax.f32 %v764, 0.0
    %v829 = vmax.f32 %v765, 0.0
    %v830 = vmax.f32 %v766, 0.0
    %v831 = vmax.f32 %v767, 0.0
    %v832 = vmax.f32 %v768, 0.0
    %v833 = vmax.f32 %v769, 0.0
    %v834 = vmax.f32 %v770, 0.0
    %v835 = vmax.f32 %v771, 0.0
    %v836 = vmax.f32 %v772, 0.0
    %v837 = vmax.f32 %v773, 0.0
    %v838 = vmax.f32 %v774, 0.0
    %v839 = vmax.f32 %v775, 0.0
    %v840 = vmax.f32 %v776, 0.0
    %v841 = vmax.f32 %v777, 0.0
    %v842 = vmax.f32 %v778, 0.0
    %v843 = vmax.f32 %v779, 0.0
    %v844 = vmax.f32 %v780, 0.0
    %v845 = vmax.f32 %v781, 0.0
    %v846 = vmax.f32 %v782, 0.0
    %v847 = vmax.f32 %v783, 0.0
    %v848 = vmax.f32 %v784, 0.0
    %v849 = vmax.f32 %v785, 0.0
    %v850 = vmax.f32 %v786, 0.0
    %v851 = vmax.f32 %v787, 0.0
    %v852 = vmax.f32 %v788, 0.0
    %v853 = vmax.f32 %v789, 0.0
    %v854 = vmax.f32 %v790, 0.0
    %v855 = vmax.f32 %v791, 0.0
    %v856 = vmax.f32 %v792, 0.0
    %v857 = vmax.f32 %v793, 0.0
    %v858 = vmax.f32 %v794, 0.0
    %v859 = vmax.f32 %v795, 0.0
    %860 = vst [vmem:[#allocation2] sm:$0xff] %v796
    %861 = vst [vmem:[#allocation2 + $0x8] sm:$0xff] %v797
    %862 = vst [vmem:[#allocation2 + $0x10] sm:$0xff] %v798
    %863 = vst [vmem:[#allocation2 + $0x18] sm:$0xff] %v799
    %864 = vst [vmem:[#allocation2 + $0x20] sm:$0xff] %v800
    %865 = vst [vmem:[#allocation2 + $0x28] sm:$0xff] %v801
    %866 = vst [vmem:[#allocation2 + $0x30] sm:$0xff] %v802
    %867 = vst [vmem:[#allocation2 + $0x38] sm:$0xff] %v803
    %868 = vst [vmem:[#allocation2 + $0x40] sm:$0xff] %v804
    %869 = vst [vmem:[#allocation2 + $0x48] sm:$0xff] %v805
    %870 = vst [vmem:[#allocation2 + $0x50] sm:$0xff] %v806
    %871 = vst [vmem:[#allocation2 + $0x58] sm:$0xff] %v807
    %872 = vst [vmem:[#allocation2 + $0x60] sm:$0xff] %v808
    %873 = vst [vmem:[#allocation2 + $0x68] sm:$0xff] %v809
    %874 = vst [vmem:[#allocation2 + $0x70] sm:$0xff] %v810
    %875 = vst [vmem:[#allocation2 + $0x78] sm:$0xff] %v811
    %876 = vst [vmem:[#allocation2 + $0x80] sm:$0xff] %v812
    %877 = vst [vmem:[#allocation2 + $0x88] sm:$0xff] %v813
    %878 = vst [vmem:[#allocation2 + $0x90] sm:$0xff] %v814
    %879 = vst [vmem:[#allocation2 + $0x98] sm:$0xff] %v815
    %880 = vst [vmem:[#allocation2 + $0xa0] sm:$0xff] %v816
    %881 = vst [vmem:[#allocation2 + $0xa8] sm:$0xff] %v817
    %882 = vst [vmem:[#allocation2 + $0xb0] sm:$0xff] %v818
    %883 = vst [vmem:[#allocation2 + $0xb8] sm:$0xff] %v819
    %884 = vst [vmem:[#allocation2 + $0xc0] sm:$0xff] %v820
    %885 = vst [vmem:[#allocation2 + $0xc8] sm:$0xff] %v821
    %886 = vst [vmem:[#allocation2 + $0xd0] sm:$0xff] %v822
    %887 = vst [vmem:[#allocation2 + $0xd8] sm:$0xff] %v823
    %888 = vst [vmem:[#allocation2 + $0xe0] sm:$0xff] %v824
    %889 = vst [vmem:[#allocation2 + $0xe8] sm:$0xff] %v825
    %890 = vst [vmem:[#allocation2 + $0xf0] sm:$0xff] %v826
    %891 = vst [vmem:[#allocation2 + $0xf8] sm:$0xff] %v827
    %892 = vst [vmem:[#allocation2 + $0x100] sm:$0xff] %v828
    %893 = vst [vmem:[#allocation2 + $0x108] sm:$0xff] %v829
    %894 = vst [vmem:[#allocation2 + $0x110] sm:$0xff] %v830
    %895 = vst [vmem:[#allocation2 + $0x118] sm:$0xff] %v831
    %896 = vst [vmem:[#allocation2 + $0x120] sm:$0xff] %v832
    %897 = vst [vmem:[#allocation2 + $0x128] sm:$0xff] %v833
    %898 = vst [vmem:[#allocation2 + $0x130] sm:$0xff] %v834
    %899 = vst [vmem:[#allocation2 + $0x138] sm:$0xff] %v835
    %900 = vst [vmem:[#allocation2 + $0x140] sm:$0xff] %v836
    %901 = vst [vmem:[#allocation2 + $0x148] sm:$0xff] %v837
    %902 = vst [vmem:[#allocation2 + $0x150] sm:$0xff] %v838
    %903 = vst [vmem:[#allocation2 + $0x158] sm:$0xff] %v839
    %904 = vst [vmem:[#allocation2 + $0x160] sm:$0xff] %v840
    %905 = vst [vmem:[#allocation2 + $0x168] sm:$0xff] %v841
    %906 = vst [vmem:[#allocation2 + $0x170] sm:$0xff] %v842
    %907 = vst [vmem:[#allocation2 + $0x178] sm:$0xff] %v843
    %908 = vst [vmem:[#allocation2 + $0x180] sm:$0xff] %v844
    %909 = vst [vmem:[#allocation2 + $0x188] sm:$0xff] %v845
    %910 = vst [vmem:[#allocation2 + $0x190] sm:$0xff] %v846
    %911 = vst [vmem:[#allocation2 + $0x198] sm:$0xff] %v847
    %912 = vst [vmem:[#allocation2 + $0x1a0] sm:$0xff] %v848
    %913 = vst [vmem:[#allocation2 + $0x1a8] sm:$0xff] %v849
    %914 = vst [vmem:[#allocation2 + $0x1b0] sm:$0xff] %v850
    %915 = vst [vmem:[#allocation2 + $0x1b8] sm:$0xff] %v851
    %916 = vst [vmem:[#allocation2 + $0x1c0] sm:$0xff] %v852
    %917 = vst [vmem:[#allocation2 + $0x1c8] sm:$0xff] %v853
    %918 = vst [vmem:[#allocation2 + $0x1d0] sm:$0xff] %v854
    %919 = vst [vmem:[#allocation2 + $0x1d8] sm:$0xff] %v855
    %920 = vst [vmem:[#allocation2 + $0x1e0] sm:$0xff] %v856
    %921 = vst [vmem:[#allocation2 + $0x1e8] sm:$0xff] %v857
    %922 = vst [vmem:[#allocation2 + $0x1f0] sm:$0xff] %v858
    %923 = vst [vmem:[#allocation2 + $0x1f8] sm:$0xff] %v859
    // Predicated region
    $region14: #{basic_conv2d.1} parent=1 // pred_check
      _
    $region15: #{basic_conv2d.1} parent=1 // pred_check_branch
      %925 = sbr.rel (0) target = $region17
    $region16: #{basic_conv2d.1} parent=1 // pred_region
      %s927 = ssub.s32 8192, 8192
      %928 = vsyncadd [#allocation3], %s927
      %s929 = sshll.u32 [#allocation2], 4
      %s930 = int_to_ptr.vmem [resolvable:$true] %s929
      %935 = dma.vmem_to_hbm [thread:$0]  %s930, 8192, %s3, [#allocation3], 128, 128, 8
    $region17: #{basic_conv2d.1} parent=1 // pred_fallthru
      _
    // Predicated region
    $region18: #{basic_conv2d.1} parent=1 // pred_check
      _
    $region19: #{basic_conv2d.1} parent=1 // pred_check_branch
      %937 = sbr.rel (0) target = $region21
    $region20: #{basic_conv2d.1} parent=1 // pred_region
      %938 = dma.done [#allocation3], 8192
    $region21: #{basic_conv2d.1} parent=1 // pred_fallthru
      _
    %939 = vsyncpa [#allocation3], 1

</llo_original>
